<compile_context>
chip_gen: v6e
topology: v6e:2x2x1
jax: 0.10.0
libtpu: 0.0.40
codegen_flags: <defaults>
</compile_context>

<pallas_src>
import functools

import jax
import jax.numpy as jnp
import numpy as np
from jax.experimental import pallas as pl
from jax.experimental.pallas import tpu as pltpu

_MIB = 1024 * 1024
# Per-grid-step VMEM budget for tile selection: 2x input buffers + 2x2 output
# buffers + scratch/temps must fit.  20 MiB is comfortable on every generation
# once we raise the scoped limit (v7x: 64 MiB physical, v5e/v6e: 128 MiB).
_VMEM_TILE_BUDGET = 20 * _MIB
# Only use the MXU banded-matmul path if the (L, L) band stays small.
_MAX_BAND_BYTES = 8 * _MIB


def _round_up(x, m):
    return ((x + m - 1) // m) * m


def _series_decomp_kernel(x_ref, res_ref, mean_ref, *scratch,
                          L, k, pad, lead, use_matmul):
    """One (batch, channel-tile) step.

    x_ref:    (L, tC)  input tile (batch dim squeezed out)
    res_ref:  (L, tC)  x - moving_mean
    mean_ref: (L, tC)  moving_mean
    scratch:  () for the matmul path, or a single
              (lead + L + pad, tC) float32 VMEM buffer for the tap path.
    """
    tC = x_ref.shape[-1]
    inv_k = jnp.float32(1.0 / k)

    if use_matmul:
        # Banded averaging matrix on the MXU: band[i, t] = 1 iff |t - i| <= pad.
        # Out-of-range taps are exactly the zero padding of AvgPool1d, so no
        # padded scratch is needed at all on this path.
        row = jax.lax.broadcasted_iota(jnp.int32, (L, L), 0)
        col = jax.lax.broadcasted_iota(jnp.int32, (L, L), 1)
        band = jnp.where(jnp.abs(col - row) <= pad,
                         jnp.float32(1.0), jnp.float32(0.0))
        sums = jnp.dot(band, x_ref[...].astype(jnp.float32),
                       preferred_element_type=jnp.float32,
                       precision=jax.lax.Precision.HIGHEST)
        mean = sums * inv_k
        mean_ref[...] = mean.astype(mean_ref.dtype)
        # Re-read x from VMEM for the residual (vld slot has slack).
        res_ref[...] = (x_ref[...].astype(jnp.float32) - mean).astype(res_ref.dtype)
        return

    (xpad_ref,) = scratch

    # Zero halos (left fill starts at row 0 -> sublane-aligned store), then x,
    # cast to f32 exactly once.  Do NOT gate this on program_id (megacore).
    if lead > 0:
        xpad_ref[0:lead, :] = jnp.zeros((lead, tC), jnp.float32)
    if pad > 0:
        xpad_ref[lead + L:, :] = jnp.zeros((pad, tC), jnp.float32)
    xpad_ref[lead:lead + L, :] = x_ref[...].astype(jnp.float32)

    # Moving sum: k statically-unrolled shifted adds in f32 (small k only).
    start = lead - pad                      # >= 0; center tap (j == pad) is aligned
    acc = xpad_ref[start:start + L, :]
    for j in range(1, k):
        acc = acc + xpad_ref[start + j:start + j + L, :]
    mean = acc * inv_k

    mean_ref[...] = mean.astype(mean_ref.dtype)
    # Residual from the aligned f32 center slice (no second cast, no long-lived
    # x value carried across the tap loop).
    res_ref[...] = (xpad_ref[lead:lead + L, :] - mean).astype(res_ref.dtype)


def _choose_channel_tile(B, L, C, itemsize, scratch_rows, use_matmul):
    """Largest lane-dense channel tile that fits the VMEM budget, keeping the
    grid at >= 2 steps when possible (v7x megacore)."""
    band_bytes = L * L * 4 if use_matmul else 0

    def usage(tc):
        blk = L * tc * itemsize
        temps = (2 * L * tc * 4) if use_matmul else (scratch_rows * tc * 4)
        return 6 * blk + temps + band_bytes   # 2x in-bufs + 2x2 out-bufs + temps

    if C % 128 != 0:
        # (8,128)/full-extent rule: last block dim must be 128-multiple or full C.
        return C, usage(C)

    cands = [c for c in range(C, 0, -128) if C % c == 0]   # largest first
    tc = next((c for c in cands if usage(c) <= _VMEM_TILE_BUDGET), 128)
    if B * (C // tc) < 2:                    # keep both v7x TensorCores busy
        smaller = [c for c in cands if c < tc]
        if smaller:
            tc = smaller[0]
    return tc, usage(tc)


def series_decomp_forward(x, kernel_size):
    """x: (B, L, C) -> (res, moving_mean), both (B, L, C)."""
    assert kernel_size % 2 == 1, (
        "series_decomp requires an odd kernel_size (as used in Autoformer); "
        "even kernels change the output length of AvgPool1d.")
    B, L, C = x.shape
    pad = (kernel_size - 1) // 2

    # MXU path for large k (Autoformer default k=25), tap path for small k.
    use_matmul = (kernel_size >= 16) and (L * L * 4 <= _MAX_BAND_BYTES)

    # Sublane-aligned left halo so the x store / center-tap loads are aligned.
    lead = _round_up(pad, 8)
    scratch_rows = lead + L + pad

    itemsize = jnp.dtype(x.dtype).itemsize
    tC, usage = _choose_channel_tile(B, L, C, itemsize, scratch_rows, use_matmul)
    n_c = C // tC

    # Raise the scoped VMEM limit explicitly (v5e default is only 16 MiB), but
    # never above v7x's 64 MiB physical VMEM.
    vmem_limit = int(min(64 * _MIB, max(32 * _MIB, usage + 8 * _MIB)))

    kernel = functools.partial(_series_decomp_kernel, L=L, k=kernel_size,
                               pad=pad, lead=lead, use_matmul=use_matmul)

    blk = lambda: pl.BlockSpec((None, L, tC), lambda b, c: (b, 0, c))
    scratch_shapes = [] if use_matmul else [
        pltpu.VMEM((scratch_rows, tC), jnp.float32)]

    res, mean = pl.pallas_call(
        kernel,
        out_shape=(jax.ShapeDtypeStruct((B, L, C), x.dtype),
                   jax.ShapeDtypeStruct((B, L, C), x.dtype)),
        grid_spec=pltpu.PrefetchScalarGridSpec(
            num_scalar_prefetch=0,
            grid=(B, n_c),
            in_specs=[blk()],
            out_specs=(blk(), blk()),
            scratch_shapes=scratch_shapes,
        ),
        compiler_params=pltpu.CompilerParams(
            dimension_semantics=("parallel", "parallel"),
            vmem_limit_bytes=vmem_limit),
    )(x)
    return res, mean


def _reference(x, k):
    """Pure-JAX reference: zero-padded windowed mean (count_include_pad=True)."""
    p = (k - 1) // 2
    L = x.shape[1]
    x_pad = jnp.pad(x, ((0, 0), (p, p), (0, 0)))
    mean = sum(x_pad[:, j:j + L, :] for j in range(k)) / k
    return x - mean, mean


if __name__ == "__main__":
    key0, key1 = jax.random.split(jax.random.PRNGKey(0))

    # Case 1: small kernel -> statically unrolled shifted-add path.
    B, L, C, k = 2, 16, 32, 5
    x = jax.random.normal(key0, (B, L, C), dtype=jnp.float32)
    res, mean = series_decomp_forward(x, k)
    res = jax.block_until_ready(res)
    mean = jax.block_until_ready(mean)
    assert res.shape == (B, L, C) and mean.shape == (B, L, C)
    res_r, mean_r = _reference(x, k)
    np.testing.assert_allclose(np.asarray(mean), np.asarray(mean_r),
                               rtol=1e-5, atol=1e-5)
    np.testing.assert_allclose(np.asarray(res), np.asarray(res_r),
                               rtol=1e-5, atol=1e-5)

    # Case 2: Autoformer-default-style large kernel (k=25) -> MXU banded-matmul
    # path, lane-dense 128-wide channels.
    B, L, C, k = 2, 64, 128, 25
    x = jax.random.normal(key1, (B, L, C), dtype=jnp.float32)
    res, mean = series_decomp_forward(x, k)
    res = jax.block_until_ready(res)
    mean = jax.block_until_ready(mean)
    res_r, mean_r = _reference(x, k)
    np.testing.assert_allclose(np.asarray(mean), np.asarray(mean_r),
                               rtol=1e-4, atol=2e-5)
    np.testing.assert_allclose(np.asarray(res), np.asarray(res_r),
                               rtol=1e-4, atol=2e-5)

    print("KERNEL_OK")
</pallas_src>

<mosaic_0001>
module attributes {stable_mosaic.version = 11 : i64} {
  func.func @_series_decomp_kernel(%arg0: i32, %arg1: i32, %arg2: memref<1x16x32xf32, #tpu.memory_space<vmem>>, %arg3: memref<1x16x32xf32, #tpu.memory_space<vmem>>, %arg4: memref<1x16x32xf32, #tpu.memory_space<vmem>>, %arg5: memref<26x32xf32, #tpu.memory_space<vmem>>) attributes {dimension_semantics = [#tpu.dimension_semantics<parallel>, #tpu.dimension_semantics<parallel>], iteration_bounds = array<i64: 2, 1>, scalar_prefetch = 0 : i64, scratch_operands = 1 : i64, tpu.core_type = #tpu.core_type<tc>, window_params = [{transform_indices = @transform_0, window_bounds = array<i64: 1, 16, 32>}, {transform_indices = @transform_1, window_bounds = array<i64: 1, 16, 32>}, {transform_indices = @transform_2, window_bounds = array<i64: 1, 16, 32>}]} {
    %cst = arith.constant 0.000000e+00 : f32
    %0 = vector.broadcast %cst : f32 to vector<8x32xf32>
    %c0 = arith.constant 0 : index
    %c0_0 = arith.constant 0 : index
    %1 = vector.load %arg5[%c0, %c0_0] : memref<26x32xf32, #tpu.memory_space<vmem>>, vector<8x32xf32>
    tpu.vector_store %arg5[%c0, %c0_0], %0 {strides = array<i32>} : memref<26x32xf32, #tpu.memory_space<vmem>>, vector<8x32xf32>,
    %cst_1 = arith.constant 0.000000e+00 : f32
    %2 = vector.broadcast %cst_1 : f32 to vector<2x32xf32>
    %c24 = arith.constant 24 : index
    %c0_2 = arith.constant 0 : index
    %3 = vector.load %arg5[%c24, %c0_2] : memref<26x32xf32, #tpu.memory_space<vmem>>, vector<2x32xf32>
    tpu.vector_store %arg5[%c24, %c0_2], %2 {strides = array<i32>} : memref<26x32xf32, #tpu.memory_space<vmem>>, vector<2x32xf32>,
    %c0_3 = arith.constant 0 : index
    %c0_4 = arith.constant 0 : index
    %c0_5 = arith.constant 0 : index
    %4 = vector.load %arg2[%c0_3, %c0_4, %c0_5] : memref<1x16x32xf32, #tpu.memory_space<vmem>>, vector<1x16x32xf32>
    %5 = vector.shape_cast %4 : vector<1x16x32xf32> to vector<16x32xf32>
    %c8 = arith.constant 8 : index
    %c0_6 = arith.constant 0 : index
    %6 = vector.load %arg5[%c8, %c0_6] : memref<26x32xf32, #tpu.memory_space<vmem>>, vector<16x32xf32>
    tpu.vector_store %arg5[%c8, %c0_6], %5 {strides = array<i32>} : memref<26x32xf32, #tpu.memory_space<vmem>>, vector<16x32xf32>,
    %c6 = arith.constant 6 : index
    %c0_7 = arith.constant 0 : index
    %7 = vector.load %arg5[%c6, %c0_7] : memref<26x32xf32, #tpu.memory_space<vmem>>, vector<16x32xf32>
    %c7 = arith.constant 7 : index
    %c0_8 = arith.constant 0 : index
    %8 = vector.load %arg5[%c7, %c0_8] : memref<26x32xf32, #tpu.memory_space<vmem>>, vector<16x32xf32>
    %9 = arith.addf %7, %8 : vector<16x32xf32>
    %c8_9 = arith.constant 8 : index
    %c0_10 = arith.constant 0 : index
    %10 = vector.load %arg5[%c8_9, %c0_10] : memref<26x32xf32, #tpu.memory_space<vmem>>, vector<16x32xf32>
    %11 = arith.addf %9, %10 : vector<16x32xf32>
    %c9 = arith.constant 9 : index
    %c0_11 = arith.constant 0 : index
    %12 = vector.load %arg5[%c9, %c0_11] : memref<26x32xf32, #tpu.memory_space<vmem>>, vector<16x32xf32>
    %13 = arith.addf %11, %12 : vector<16x32xf32>
    %c10 = arith.constant 10 : index
    %c0_12 = arith.constant 0 : index
    %14 = vector.load %arg5[%c10, %c0_12] : memref<26x32xf32, #tpu.memory_space<vmem>>, vector<16x32xf32>
    %15 = arith.addf %13, %14 : vector<16x32xf32>
    %cst_13 = arith.constant 2.000000e-01 : f32
    %16 = vector.broadcast %cst_13 : f32 to vector<16x32xf32>
    %17 = arith.mulf %15, %16 : vector<16x32xf32>
    %c0_14 = arith.constant 0 : index
    %c0_15 = arith.constant 0 : index
    %c0_16 = arith.constant 0 : index
    %18 = vector.load %arg4[%c0_14, %c0_15, %c0_16] : memref<1x16x32xf32, #tpu.memory_space<vmem>>, vector<1x16x32xf32>
    %19 = vector.shape_cast %18 : vector<1x16x32xf32> to vector<16x32xf32>
    %20 = vector.shape_cast %17 : vector<16x32xf32> to vector<1x16x32xf32>
    tpu.vector_store %arg4[%c0_14, %c0_15, %c0_16], %20 {strides = array<i32>} : memref<1x16x32xf32, #tpu.memory_space<vmem>>, vector<1x16x32xf32>,
    %c8_17 = arith.constant 8 : index
    %c0_18 = arith.constant 0 : index
    %21 = vector.load %arg5[%c8_17, %c0_18] : memref<26x32xf32, #tpu.memory_space<vmem>>, vector<16x32xf32>
    %22 = arith.subf %21, %17 : vector<16x32xf32>
    %c0_19 = arith.constant 0 : index
    %c0_20 = arith.constant 0 : index
    %c0_21 = arith.constant 0 : index
    %23 = vector.load %arg3[%c0_19, %c0_20, %c0_21] : memref<1x16x32xf32, #tpu.memory_space<vmem>>, vector<1x16x32xf32>
    %24 = vector.shape_cast %23 : vector<1x16x32xf32> to vector<16x32xf32>
    %25 = vector.shape_cast %22 : vector<16x32xf32> to vector<1x16x32xf32>
    tpu.vector_store %arg3[%c0_19, %c0_20, %c0_21], %25 {strides = array<i32>} : memref<1x16x32xf32, #tpu.memory_space<vmem>>, vector<1x16x32xf32>,
    return
  }
  func.func @transform_0(%arg0: i32, %arg1: i32) -> (i32, i32, i32) {
    %c0_i32 = arith.constant 0 : i32
    %c0_i32_0 = arith.constant 0 : i32
    return %arg0, %c0_i32, %arg1 : i32, i32, i32
  }
  func.func @transform_1(%arg0: i32, %arg1: i32) -> (i32, i32, i32) {
    %c0_i32 = arith.constant 0 : i32
    %c0_i32_0 = arith.constant 0 : i32
    return %arg0, %c0_i32, %arg1 : i32, i32, i32
  }
  func.func @transform_2(%arg0: i32, %arg1: i32) -> (i32, i32, i32) {
    %c0_i32 = arith.constant 0 : i32
    %c0_i32_0 = arith.constant 0 : i32
    return %arg0, %c0_i32, %arg1 : i32, i32, i32
  }
}

</mosaic_0001>

<llo_original>
// kernel: tpu_custom_call.1
$region0: #{tpu_custom_call.1}
  #allocation0 [shape = 'u32[]', space=smem, size = 0x4, offset = 0x4, fixed_abs, tag = 'smem constant byte address 0x4 - core index']
  #allocation1 [shape = 'u32[144,128]{1,0:T(1,128)}', space=vmem, size = 0x12000, scoped, tag = 'internal scratch']
  #allocation2 [shape = 'f32[26,32]{1,0:T(8,128)}', space=vmem, size = 0x4000, scoped, tag = 'scratch operand']
  %s0 = inlined_call_operand.hbm [shape: f32[2,16,32], index: 0, kind: input, shape index: {}]
  %s1 = inlined_call_operand.hbm [shape: f32[2,16,32], index: 1, kind: output, shape index: {0}]
  %s2 = inlined_call_operand.hbm [shape: f32[2,16,32], index: 2, kind: output, shape index: {1}]
  %3 = xla_tuple %s1, %s2
  %s4 = sld [smem:[#allocation0]]
  $region49: #{tpu_custom_call.1} parent=0
    _
  %s6 = ssub.s32 1, %s4
  %s7 = scalar_select 0, %s6, %s4
  $region1: #{tpu_custom_call.1} parent=0
    #allocation3 [shape = 'u8[16384]{0}', space=vmem, size = 0x4000, scoped, tag = 'input window, operand 0']
    #allocation4 [shape = 's32[2]{0}', space=sflag, size = 0x8, scoped, tag = 'scoped memory for tpu_custom_call.1']
    #allocation5 [shape = 's32[2]{0}', space=sflag, size = 0x8, scoped, tag = 'scoped memory for tpu_custom_call.1']
    #allocation6 [shape = 'u8[16384]{0}', space=vmem, size = 0x4000, scoped, tag = 'output window, operand 0']
    #allocation7 [shape = 'u8[16384]{0}', space=vmem, size = 0x4000, scoped, tag = 'output window, operand 1']
    #allocation8 [shape = 's32[2]{0}', space=sflag, size = 0x8, scoped, tag = 'scoped memory for tpu_custom_call.1']
    %8 = vsyncpa [#allocation4], 0
    %s9 = scalar_lea.sflag [#allocation4], 1
    %10 = vsyncpa %s9, 0
    %11 = vsyncpa [#allocation5], 0
    %s12 = scalar_lea.sflag [#allocation5], 1
    %13 = vsyncpa %s12, 0
    %14 = vsyncpa [#allocation8], 0
    %s15 = scalar_lea.sflag [#allocation8], 1
    %16 = vsyncpa %s15, 0
    loop: start=0, step=1, limit=4
    $region2: #{tpu_custom_call.1} parent=1 // loop_pre_header
      _
    $region3: #{tpu_custom_call.1} parent=1 // loop_header
      %s18 = sphi 0, %s22
      %p19 = scmp.ge.s32.totalorder %s18, 4
      %s25 = sphi 0, %s37
      %s26 = sphi 0, %s33
      %s27 = sphi 0, %s25
      %s28 = sphi 0, %s26
      %s29 = sphi 0, %s27
      %s30 = sphi 0, %s28
      %s42 = sphi 0, %s44
      %s45 = sphi 0, %s42
      %s46 = sphi 0, %s45
      %s62 = sphi 0, %s46
      %s70 = sphi 0, %s72
      %s73 = sphi 0, %s70
      %s74 = sphi 0, %s73
      %s90 = sphi 0, %s74
      %s98 = sphi 0, %s100
      %s101 = sphi 0, %s98
      %s102 = sphi 0, %s101
      %s118 = sphi 0, %s102
    $region4: #{tpu_custom_call.1} parent=1 // loop_header_branch
      %21 = sbr.rel (%p19) target = $region8
    $region5: #{tpu_custom_call.1} parent=1 // loop_body
      %s23 = ssub.s32 %s18, 1
      %s24 = ssub.s32 %s18, 2
      %s31 = sadd.s32 1, %s26
      %p32 = scmp.ge.s32.totalorder %s31, 1
      %s33 = scalar_select %p32, 0, %s31
      %s34 = sadd.s32 1, %s25
      %s35 = scalar_select %p32, %s34, %s25
      %p36 = scmp.ge.s32.totalorder %s35, 2
      %s37 = scalar_select %p36, 0, %s35
      %s38 = ssub.s32 %s25, %s37
      %s39 = ssub.s32 %s26, %s33
      %s40 = sor.u32 %s38, %s39
      %p41 = scmp.eq.s32.totalorder %s40, 0
      %s43 = sadd.s32 %s42, 1
      %s44 = scalar_select %p41, %s42, %s43
      %p47 = pneg %p41
      %p48 = scmp.eq.s32.totalorder %s18, 1
      %p49 = por %p47, %p48
      %p50 = scmp.ne.s32.totalorder %s42, %s45
      %p51 = scmp.eq.s32.totalorder %s18, 0
      %p52 = por %p50, %p51
      %p53 = scmp.ne.s32.totalorder %s42, %s45
      %p54 = scmp.eq.s32.totalorder %s23, 1
      %p55 = por %p53, %p54
      %p56 = scmp.ne.s32.totalorder %s45, %s46
      %p57 = scmp.eq.s32.totalorder %s23, 0
      %p58 = por %p56, %p57
      %p59 = scmp.ne.s32.totalorder %s45, %s46
      %p60 = scmp.eq.s32.totalorder %s24, 1
      %p61 = por %p59, %p60
      %p63 = scmp.ne.s32.totalorder %s46, %s62
      %p64 = scmp.eq.s32.totalorder %s24, 0
      %p65 = por %p63, %p64
      %s66 = ssub.s32 %s25, %s37
      %s67 = ssub.s32 %s26, %s33
      %s68 = sor.u32 %s66, %s67
      %p69 = scmp.eq.s32.totalorder %s68, 0
      %s71 = sadd.s32 %s70, 1
      %s72 = scalar_select %p69, %s70, %s71
      %p75 = pneg %p69
      %p76 = scmp.eq.s32.totalorder %s18, 1
      %p77 = por %p75, %p76
      %p78 = scmp.ne.s32.totalorder %s70, %s73
      %p79 = scmp.eq.s32.totalorder %s18, 0
      %p80 = por %p78, %p79
      %p81 = scmp.ne.s32.totalorder %s70, %s73
      %p82 = scmp.eq.s32.totalorder %s23, 1
      %p83 = por %p81, %p82
      %p84 = scmp.ne.s32.totalorder %s73, %s74
      %p85 = scmp.eq.s32.totalorder %s23, 0
      %p86 = por %p84, %p85
      %p87 = scmp.ne.s32.totalorder %s73, %s74
      %p88 = scmp.eq.s32.totalorder %s24, 1
      %p89 = por %p87, %p88
      %p91 = scmp.ne.s32.totalorder %s74, %s90
      %p92 = scmp.eq.s32.totalorder %s24, 0
      %p93 = por %p91, %p92
      %s94 = ssub.s32 %s25, %s37
      %s95 = ssub.s32 %s26, %s33
      %s96 = sor.u32 %s94, %s95
      %p97 = scmp.eq.s32.totalorder %s96, 0
      %s99 = sadd.s32 %s98, 1
      %s100 = scalar_select %p97, %s98, %s99
      %p103 = pneg %p97
      %p104 = scmp.eq.s32.totalorder %s18, 1
      %p105 = por %p103, %p104
      %p106 = scmp.ne.s32.totalorder %s98, %s101
      %p107 = scmp.eq.s32.totalorder %s18, 0
      %p108 = por %p106, %p107
      %p109 = scmp.ne.s32.totalorder %s98, %s101
      %p110 = scmp.eq.s32.totalorder %s23, 1
      %p111 = por %p109, %p110
      %p112 = scmp.ne.s32.totalorder %s101, %s102
      %p113 = scmp.eq.s32.totalorder %s23, 0
      %p114 = por %p112, %p113
      %p115 = scmp.ne.s32.totalorder %s101, %s102
      %p116 = scmp.eq.s32.totalorder %s24, 1
      %p117 = por %p115, %p116
      %p119 = scmp.ne.s32.totalorder %s102, %s118
      %p120 = scmp.eq.s32.totalorder %s24, 0
      %p121 = por %p119, %p120
      %p122 = scmp.le.s32.totalorder 1, %s18
      %p123 = scmp.lt.s32.totalorder %s18, 3
      %p124 = pnand %p122, %p123
      %p125 = pneg %p124
      // Predicated region
      $region9: #{tpu_custom_call.1} parent=5 // pred_check
        _
      $region10: #{tpu_custom_call.1} parent=5 // pred_check_branch
        %127 = sbr.rel (%p124) target = $region12
      $region11: #{tpu_custom_call.1} parent=5 // pred_region
        %s128 = ssub.s32 %s18, 1
      $region12: #{tpu_custom_call.1} parent=5 // pred_fallthru
        _
      %p129 = scmp.lt.s32.totalorder %s18, 2
      // Predicated region
      $region13: #{tpu_custom_call.1} parent=5 // pred_check
        %p130 = pneg %p129
      $region14: #{tpu_custom_call.1} parent=5 // pred_check_branch
        %132 = sbr.rel (%p130) target = $region16
      $region15: #{tpu_custom_call.1} parent=5 // pred_region
        // Predicated region
        $region17: #{tpu_custom_call.1} parent=15 // pred_check
          %p133 = pneg %p52
        $region18: #{tpu_custom_call.1} parent=15 // pred_check_branch
          %135 = sbr.rel (%p133) target = $region20
        $region19: #{tpu_custom_call.1} parent=15 // pred_region
          %s136 = sand.u32 %s42, 1
          %s137 = scalar_lea.sflag [#allocation4], %s136
          %s138 = sand.u32 %s42, 1
          %s139 = smul.addr %s138, 16
          %s140 = scalar_lea.vmem [#allocation3], %s139
          %s142 = ssub.s32 256, 256
          %143 = vsyncadd %s137, %s142
          %s144 = smul.addr %s25, 2
          %s145 = sadd.s32 %s26, %s144
          %s146 = smul.addr %s145, 128
          %s147 = scalar_lea.hbm %s0, %s146
          %s148 = sshll.u32 %s140, 4
          %s149 = int_to_ptr.vmem [resolvable:$true] %s148
          %154 = dma.hbm_to_vmem [thread:$0]  %s147, 256, %s149, %s137, 128, 128, 8
        $region20: #{tpu_custom_call.1} parent=15 // pred_fallthru
          _
      $region16: #{tpu_custom_call.1} parent=5 // pred_fallthru
        _
      %p155 = scmp.le.s32.totalorder 1, %s18
      %p156 = scmp.lt.s32.totalorder %s18, 3
      %p157 = pnand %p155, %p156
      %p158 = pneg %p157
      // Predicated region
      $region21: #{tpu_custom_call.1} parent=5 // pred_check
        _
      $region22: #{tpu_custom_call.1} parent=5 // pred_check_branch
        %160 = sbr.rel (%p157) target = $region24
      $region23: #{tpu_custom_call.1} parent=5 // pred_region
        %s161 = ssub.s32 %s18, 1
        %s162 = sand.u32 %s45, 1
        %s163 = scalar_lea.sflag [#allocation4], %s162
        %s164 = sand.u32 %s45, 1
        %s165 = smul.addr %s164, 16
        %s166 = scalar_lea.vmem [#allocation3], %s165
        // Predicated region
        $region25: #{tpu_custom_call.1} parent=23 // pred_check
          %p167 = pneg %p58
        $region26: #{tpu_custom_call.1} parent=23 // pred_check_branch
          %169 = sbr.rel (%p167) target = $region28
        $region27: #{tpu_custom_call.1} parent=23 // pred_region
          %170 = dma.done %s163, 256
        $region28: #{tpu_custom_call.1} parent=23 // pred_fallthru
          _
        %s171 = sand.u32 %s45, 1
        %s172 = scalar_lea.sflag [#allocation4], %s171
        %s173 = sand.u32 %s45, 1
        %s174 = smul.addr %s173, 16
        %s175 = scalar_lea.vmem [#allocation3], %s174
        %p176 = pneg %p58
        %p177 = pneg %p55
        %p178 = pneg %p86
        %p179 = pneg %p83
        %s180 = sand.u32 %s73, 1
        %s181 = scalar_lea.sflag [#allocation5], %s180
        %s182 = sand.u32 %s73, 1
        %s183 = smul.addr %s182, 16
        %s184 = scalar_lea.vmem [#allocation6], %s183
        %p185 = pneg %p114
        %p186 = pneg %p111
        %s187 = sand.u32 %s101, 1
        %s188 = scalar_lea.sflag [#allocation8], %s187
        %s189 = sand.u32 %s101, 1
        %s190 = smul.addr %s189, 16
        %s191 = scalar_lea.vmem [#allocation7], %s190
        %vm192 = vcmask 261120
        %193 = vst.msk [vmem:[#allocation2] sm:$0xff] %vm192, 0.0
        %vm194 = vcmask 254976
        %195 = vst.msk [vmem:[#allocation2 + $0x18] sm:$0x3] %vm194, 0.0
        %v196 = vld [vmem:[%s166] sm:$0xff]
        %v197 = vld [vmem:[%s166 + $0x8] sm:$0xff]
        %198 = vst.msk [vmem:[#allocation2 + $0x8] sm:$0xff] %vm192, %v196
        %199 = vst.msk [vmem:[#allocation2 + $0x10] sm:$0xff] %vm192, %v197
        %v200 = vld [vmem:[#allocation2 + $0x6] sm:$0xff]
        %v201 = vld [vmem:[#allocation2 + $0xe] sm:$0xff]
        %v202 = vld [vmem:[#allocation2 + $0x7] sm:$0xff]
        %v203 = vld [vmem:[#allocation2 + $0xf] sm:$0xff]
        %v204 = vadd.f32 %v200, %v202
        %v205 = vadd.f32 %v201, %v203
        %v206 = vld [vmem:[#allocation2 + $0x8] sm:$0xff]
        %v207 = vld [vmem:[#allocation2 + $0x10] sm:$0xff]
        %v208 = vadd.f32 %v204, %v206
        %v209 = vadd.f32 %v205, %v207
        %v210 = vld [vmem:[#allocation2 + $0x9] sm:$0xff]
        %v211 = vld [vmem:[#allocation2 + $0x11] sm:$0xff]
        %v212 = vadd.f32 %v208, %v210
        %v213 = vadd.f32 %v209, %v211
        %v214 = vld [vmem:[#allocation2 + $0xa] sm:$0xff]
        %v215 = vld [vmem:[#allocation2 + $0x12] sm:$0xff]
        %v216 = vadd.f32 %v212, %v214
        %v217 = vadd.f32 %v213, %v215
        %v218 = vmul.f32 %v216, 0.2
        %v219 = vmul.f32 %v217, 0.2
        %220 = vst.msk [vmem:[%s191] sm:$0xff] %vm192, %v218
        %221 = vst.msk [vmem:[%s191 + $0x8] sm:$0xff] %vm192, %v219
        %v222 = vld [vmem:[#allocation2 + $0x8] sm:$0xff]
        %v223 = vld [vmem:[#allocation2 + $0x10] sm:$0xff]
        %v224 = vsub.f32 %v222, %v218
        %v225 = vsub.f32 %v223, %v219
        %226 = vst.msk [vmem:[%s184] sm:$0xff] %vm192, %v224
        %227 = vst.msk [vmem:[%s184 + $0x8] sm:$0xff] %vm192, %v225
        %s228 = sand.u32 %s73, 1
        %s229 = scalar_lea.sflag [#allocation5], %s228
        %s230 = sand.u32 %s73, 1
        %s231 = smul.addr %s230, 16
        %s232 = scalar_lea.vmem [#allocation6], %s231
        %s233 = sand.u32 %s101, 1
        %s234 = scalar_lea.sflag [#allocation8], %s233
        %s235 = sand.u32 %s101, 1
        %s236 = smul.addr %s235, 16
        %s237 = scalar_lea.vmem [#allocation7], %s236
        // Predicated region
        $region29: #{tpu_custom_call.1} parent=23 // pred_check
          %p238 = pneg %p83
        $region30: #{tpu_custom_call.1} parent=23 // pred_check_branch
          %240 = sbr.rel (%p238) target = $region32
        $region31: #{tpu_custom_call.1} parent=23 // pred_region
          %s242 = ssub.s32 256, 256
          %243 = vsyncadd %s229, %s242
          %s244 = smul.addr %s27, 2
          %s245 = sadd.s32 %s28, %s244
          %s246 = smul.addr %s245, 128
          %s247 = scalar_lea.hbm %s1, %s246
          %s248 = sshll.u32 %s232, 4
          %s249 = int_to_ptr.vmem [resolvable:$true] %s248
          %254 = dma.vmem_to_hbm [thread:$0]  %s249, 256, %s247, %s229, 128, 128, 8
        $region32: #{tpu_custom_call.1} parent=23 // pred_fallthru
          _
        // Predicated region
        $region33: #{tpu_custom_call.1} parent=23 // pred_check
          %p255 = pneg %p111
        $region34: #{tpu_custom_call.1} parent=23 // pred_check_branch
          %257 = sbr.rel (%p255) target = $region36
        $region35: #{tpu_custom_call.1} parent=23 // pred_region
          %s259 = ssub.s32 256, 256
          %260 = vsyncadd %s234, %s259
          %s261 = smul.addr %s27, 2
          %s262 = sadd.s32 %s28, %s261
          %s263 = smul.addr %s262, 128
          %s264 = scalar_lea.hbm %s2, %s263
          %s265 = sshll.u32 %s237, 4
          %s266 = int_to_ptr.vmem [resolvable:$true] %s265
          %271 = dma.vmem_to_hbm [thread:$0]  %s266, 256, %s264, %s234, 128, 128, 8
        $region36: #{tpu_custom_call.1} parent=23 // pred_fallthru
          _
      $region24: #{tpu_custom_call.1} parent=5 // pred_fallthru
        _
      %p272 = scmp.le.s32.totalorder 2, %s18
      // Predicated region
      $region37: #{tpu_custom_call.1} parent=5 // pred_check
        %p273 = pneg %p272
      $region38: #{tpu_custom_call.1} parent=5 // pred_check_branch
        %275 = sbr.rel (%p273) target = $region40
      $region39: #{tpu_custom_call.1} parent=5 // pred_region
        %s276 = ssub.s32 %s18, 2
        // Predicated region
        $region41: #{tpu_custom_call.1} parent=39 // pred_check
          %p277 = pneg %p89
        $region42: #{tpu_custom_call.1} parent=39 // pred_check_branch
          %279 = sbr.rel (%p277) target = $region44
        $region43: #{tpu_custom_call.1} parent=39 // pred_region
          %s280 = sand.u32 %s74, 1
          %s281 = scalar_lea.sflag [#allocation5], %s280
          %s282 = sand.u32 %s74, 1
          %s283 = smul.addr %s282, 16
          %s284 = scalar_lea.vmem [#allocation6], %s283
          %285 = dma.done %s281, 256
        $region44: #{tpu_custom_call.1} parent=39 // pred_fallthru
          _
        // Predicated region
        $region45: #{tpu_custom_call.1} parent=39 // pred_check
          %p286 = pneg %p117
        $region46: #{tpu_custom_call.1} parent=39 // pred_check_branch
          %288 = sbr.rel (%p286) target = $region48
        $region47: #{tpu_custom_call.1} parent=39 // pred_region
          %s289 = sand.u32 %s102, 1
          %s290 = scalar_lea.sflag [#allocation8], %s289
          %s291 = sand.u32 %s102, 1
          %s292 = smul.addr %s291, 16
          %s293 = scalar_lea.vmem [#allocation7], %s292
          %294 = dma.done %s290, 256
        $region48: #{tpu_custom_call.1} parent=39 // pred_fallthru
          _
      $region40: #{tpu_custom_call.1} parent=5 // pred_fallthru
        _
    $region6: #{tpu_custom_call.1} parent=1 // loop_footer
      %s22 = sadd.s32 1, %s18
    $region7: #{tpu_custom_call.1} parent=1 // loop_footer_branch
      %17 = sbr.rel target = $region3
    $region8: #{tpu_custom_call.1} parent=1 // loop_exit
      _
    %295 = vsyncpa [#allocation4], 1
    %s296 = scalar_lea.sflag [#allocation4], 1
    %297 = vsyncpa %s296, 1
    %298 = vsyncpa [#allocation5], 1
    %s299 = scalar_lea.sflag [#allocation5], 1
    %300 = vsyncpa %s299, 1
    %301 = vsyncpa [#allocation8], 1
    %s302 = scalar_lea.sflag [#allocation8], 1
    %303 = vsyncpa %s302, 1

</llo_original>
